<compile_context>
chip_gen: v6e
topology: v6e:2x2x1
jax: 0.10.0
libtpu: 0.0.40
codegen_flags: <defaults>
</compile_context>

<pallas_src>
import jax
import jax.numpy as jnp
from jax.experimental import pallas as pl
from jax.experimental.pallas import tpu as pltpu


# Native sublane tile height by element size (f32 -> 8, bf16 -> 16, int8 -> 32).
_SUBLANE = {4: 8, 2: 16, 1: 32}


def _round_up(x, m):
    return ((x + m - 1) // m) * m


def _sublane(dtype):
    return _SUBLANE.get(jnp.dtype(dtype).itemsize, 8)


def _vmem_capacity_bytes():
    try:
        return int(pltpu.get_tpu_info().vmem_capacity_bytes)
    except Exception:
        return 64 << 20  # conservative default (v7x has 64 MiB per TensorCore)


# ---------------------------------------------------------------------------
# Kernel: out = (x @ w1) @ w2, f32 accumulation, single lane-dense store.
# x is cast per-tile to the compute dtype INSIDE the kernel (no extra HBM pass).
# ---------------------------------------------------------------------------

def _fact_kernel(x_ref, w1_ref, w2_ref, o_ref):
    x = x_ref[...].astype(w1_ref.dtype)
    h = jnp.dot(x, w1_ref[...], preferred_element_type=jnp.float32)
    y = jnp.dot(h.astype(w2_ref.dtype), w2_ref[...],
                preferred_element_type=jnp.float32)
    o_ref[...] = y.astype(o_ref.dtype)


# ---------------------------------------------------------------------------
# Tile selection (per TPU generation, per dtype)
# ---------------------------------------------------------------------------

def _select_tiles(M, Cin, Cout, r, x_dtype, w_dtype, out_dtype, block_m,
                  tile_budget, phys_vmem):
    x_sz = jnp.dtype(x_dtype).itemsize
    w_sz = jnp.dtype(w_dtype).itemsize
    o_sz = jnp.dtype(out_dtype).itemsize
    sub = max(_sublane(x_dtype), _sublane(out_dtype))
    w_sub = _sublane(w_dtype)

    # Output-column tile: decouples the output-tile VMEM footprint from tm and
    # gives more grid steps to shard across TensorCores.  Only tile when Cout
    # is 128-aligned so stores stay lane-dense; otherwise use the full extent.
    tn_cap = 1536
    if Cout % 128 == 0 and Cout > tn_cap:
        tn = 128
        for cand in range(tn_cap, 127, -128):
            if Cout % cand == 0:
                tn = cand
                break
    else:
        tn = Cout

    # Row-tile cap: bf16 compute -> 1024; f32 -> 512 on the 64 MiB-VMEM
    # generation (v7x), 1024 on 128 MiB parts (v5e/v6e).
    if w_sz <= 2:
        tm_cap = 1024
    else:
        tm_cap = 1024 if phys_vmem >= (96 << 20) else 512
    if block_m is not None:
        tm_cap = block_m

    tm = min(_round_up(min(tm_cap, M), sub), _round_up(M, sub))
    # Guarantee >= 2 grid steps along M (DMA double-buffering + both TCs).
    if M > sub:
        tm = min(tm, _round_up(pl.cdiv(M, 2), sub))
    tm = max(tm, sub)

    def footprint(tm_, tn_):
        x_buf = 2 * tm_ * _round_up(Cin, 128) * x_sz          # double-buffered
        o_buf = 2 * tm_ * _round_up(tn_, 128) * o_sz          # double-buffered
        w1_buf = _round_up(Cin, w_sub) * _round_up(r, 128) * w_sz
        w2_buf = _round_up(r, w_sub) * _round_up(tn_, 128) * w_sz
        return x_buf + o_buf + 2 * (w1_buf + w2_buf)          # weights worst case

    while footprint(tm, tn) > tile_budget and tm > sub:
        tm = max(sub, _round_up(tm // 2, sub))

    # Prefer a tm that divides M evenly so the last step is not a ragged,
    # masked partial block (look only a little below the chosen tm).
    if M % tm != 0:
        for cand in range(tm, max(sub, tm // 2) - 1, -sub):
            if cand > 0 and M % cand == 0:
                tm = cand
                break
    return tm, tn


# ---------------------------------------------------------------------------
# Tiled (M x Cout grid) evaluation of (x2d @ w1) @ w2 on the MXU.
# ---------------------------------------------------------------------------

def _two_matmul(x2d, w1, w2, *, block_m=None, out_dtype=None):
    M, Cin = x2d.shape
    r, Cout = w2.shape
    assert w1.shape == (Cin, r), (w1.shape, (Cin, r))
    out_dtype = jnp.dtype(out_dtype if out_dtype is not None else w2.dtype)

    phys = _vmem_capacity_bytes()
    vmem_limit = min(int(phys * 7 // 8), 112 << 20)
    tile_budget = max(vmem_limit - (4 << 20), 4 << 20)

    tm, tn = _select_tiles(M, Cin, Cout, r, x2d.dtype, w1.dtype, out_dtype,
                           block_m, tile_budget, phys)
    grid_m = pl.cdiv(M, tm)
    grid_n = pl.cdiv(Cout, tn)
    grid = (grid_m, grid_n)

    flops = 2 * M * r * (Cin * grid_n + Cout)
    bytes_accessed = (M * Cin * x2d.dtype.itemsize
                      + Cin * r * w1.dtype.itemsize
                      + r * Cout * w2.dtype.itemsize
                      + M * Cout * out_dtype.itemsize)

    def build(single_buffer_weights):
        w_kw = ({"pipeline_mode": pl.Buffered(1)}
                if single_buffer_weights else {})
        grid_spec = pltpu.PrefetchScalarGridSpec(
            num_scalar_prefetch=0,
            grid=grid,
            in_specs=[
                # x tile: index_map independent of j -> resident across the
                # inner output-column axis (no re-DMA per column tile).
                pl.BlockSpec((tm, Cin), lambda i, j: (i, 0)),
                # folded W1: fully resident.
                pl.BlockSpec((Cin, r), lambda i, j: (0, 0), **w_kw),
                # folded W2: column tile j.
                pl.BlockSpec((r, tn), lambda i, j: (0, j), **w_kw),
            ],
            out_specs=pl.BlockSpec((tm, tn), lambda i, j: (i, j)),
        )
        return pl.pallas_call(
            _fact_kernel,
            out_shape=jax.ShapeDtypeStruct((M, Cout), out_dtype),
            grid_spec=grid_spec,
            compiler_params=pltpu.CompilerParams(
                dimension_semantics=("parallel", "parallel"),
                vmem_limit_bytes=vmem_limit,
            ),
            cost_estimate=pl.CostEstimate(
                flops=flops, transcendentals=0,
                bytes_accessed=bytes_accessed),
        )(x2d, w1, w2)

    try:
        return build(single_buffer_weights=True)
    except Exception:
        # Fall back to default double-buffered weight specs if pl.Buffered(1)
        # is not supported by this Pallas version.
        return build(single_buffer_weights=False)


# ---------------------------------------------------------------------------
# Weight folding (wrapper-side, negligible cost; done in f32, cast once)
# ---------------------------------------------------------------------------

def _fold_weights(params, block_idx, mode, r, scaler, dtype):
    wu = params["FacTu"]             # (r, C)   : FacTu.weight
    wv = params["FacTv"]             # (C, r)   : FacTv.weight
    blk = params["blocks"][block_idx]
    wu_t = wu.T                      # (C, r)
    wv_t = wv.T                      # (r, C)

    if mode == "attn_qkv":
        w1 = wu_t                                                    # (C, r)
        w2 = jnp.concatenate([blk["q"].T @ wv_t,
                              blk["k"].T @ wv_t,
                              blk["v"].T @ wv_t], axis=1) * scaler   # (r, 3C)
    elif mode == "attn_proj":
        w1 = wu_t                                                    # (C, r)
        w2 = (blk["proj"].T @ wv_t) * scaler                         # (r, C)
    elif mode == "mlp_1":
        fc1 = blk["fc1"]                                             # (4r, r)
        w1 = wu_t                                                    # (C, r)
        w2 = jnp.concatenate(
            [fc1[j * r:(j + 1) * r, :].T @ wv_t for j in range(4)],
            axis=1) * scaler                                         # (r, 4C)
    elif mode == "mlp_2":
        fc2 = blk["fc2"]                                             # (r, 4r)
        w1 = jnp.concatenate(
            [(fc2[:, j * r:(j + 1) * r] @ wu).T for j in range(4)],
            axis=0)                                                  # (4C, r)
        w2 = wv_t * scaler                                           # (r, C)
    else:
        raise NotImplementedError(mode)
    return w1.astype(dtype), w2.astype(dtype)


def fact_forward(params, x, block_idx, mode, B, N, C, fact_dim, scaler,
                 *, block_m=None, compute_dtype=jnp.bfloat16, out_dtype=None):
    """Pallas implementation of FacT.forward (fact_type='tt', eval mode).

    compute_dtype defaults to bf16 (HBM-roofline win); pass jnp.float32 for an
    exact match with the PyTorch f32 reference.  x is never pre-cast in the
    wrapper; the cast happens per-tile inside the kernel.
    """
    # TODO(synk): training-mode dropout (RNG masking) is not implemented.
    r = fact_dim
    cdtype = jnp.dtype(compute_dtype) if compute_dtype is not None \
        else jnp.dtype(x.dtype)
    odtype = jnp.dtype(out_dtype) if out_dtype is not None else cdtype
    w1, w2 = _fold_weights(params, block_idx, mode, r, scaler, cdtype)
    cin = x.shape[-1]
    xm = x.reshape(B * N, cin)              # no dtype cast here (see kernel)
    out = _two_matmul(xm, w1, w2, block_m=block_m, out_dtype=odtype)
    return out.reshape(B, N, w2.shape[1])


# ---------------------------------------------------------------------------
# Pure-JAX reference (mirrors the PyTorch code, dropout = identity)
# ---------------------------------------------------------------------------

def fact_reference(params, x, block_idx, mode, B, N, C, fact_dim, scaler):
    r = fact_dim
    wu, wv = params["FacTu"], params["FacTv"]
    blk = params["blocks"][block_idx]
    FacTu = lambda a: a @ wu.T
    FacTv = lambda a: a @ wv.T
    if mode == "attn_qkv":
        h = FacTu(x)
        q = FacTv(h @ blk["q"].T)
        k = FacTv(h @ blk["k"].T)
        v = FacTv(h @ blk["v"].T)
        return jnp.concatenate([q, k, v], axis=2) * scaler
    elif mode == "attn_proj":
        return FacTv(FacTu(x) @ blk["proj"].T) * scaler
    elif mode == "mlp_1":
        t = (FacTu(x) @ blk["fc1"].T).reshape(B, N, 4, r)
        return FacTv(t).reshape(B, N, 4 * C) * scaler
    elif mode == "mlp_2":
        xr = x.reshape(B, N, 4, C)
        h = FacTu(xr).reshape(B, N, 4 * r)
        return FacTv(h @ blk["fc2"].T) * scaler
    else:
        raise NotImplementedError(mode)


# ---------------------------------------------------------------------------
# Deterministic parameter construction
# ---------------------------------------------------------------------------

def make_params(key, dim, depth, fact_dim):
    r = fact_dim
    ks = jax.random.split(key, 2 + 6 * depth)
    # NOTE: the PyTorch module zero-initialises FacTv; here we use small random
    # values so the kernel produces a non-trivial, checkable output.
    scale = 0.2
    params = {
        "FacTu": jax.random.normal(ks[0], (r, dim), jnp.float32) * scale,
        "FacTv": jax.random.normal(ks[1], (dim, r), jnp.float32) * scale,
        "blocks": [],
    }
    for i in range(depth):
        kk = ks[2 + 6 * i: 2 + 6 * (i + 1)]
        params["blocks"].append({
            "q": jax.random.normal(kk[0], (r, r), jnp.float32) * scale,
            "k": jax.random.normal(kk[1], (r, r), jnp.float32) * scale,
            "v": jax.random.normal(kk[2], (r, r), jnp.float32) * scale,
            "proj": jax.random.normal(kk[3], (r, r), jnp.float32) * scale,
            "fc1": jax.random.normal(kk[4], (4 * r, r), jnp.float32) * scale,
            "fc2": jax.random.normal(kk[5], (r, 4 * r), jnp.float32) * scale,
        })
    return params


if __name__ == "__main__":
    B, N, C = 2, 8, 32
    fact_dim = 8
    depth = 2
    scaler = 0.5
    block_idx = 1

    key = jax.random.PRNGKey(0)
    kp, kx1, kx2 = jax.random.split(key, 3)
    params = make_params(kp, C, depth, fact_dim)

    x = jax.random.normal(kx1, (B, N, C), jnp.float32)           # attn_qkv/proj/mlp_1
    x_mlp2 = jax.random.normal(kx2, (B, N, 4 * C), jnp.float32)  # mlp_2 input

    cases = [
        ("attn_qkv", x),
        ("attn_proj", x),
        ("mlp_1", x),
        ("mlp_2", x_mlp2),
    ]

    ok = True
    for mode, xin in cases:
        ref = fact_reference(params, xin, block_idx, mode, B, N, C, fact_dim,
                             scaler)

        # Exact (f32 compute) path; block_m=8 exercises the multi-step grid,
        # block_m=None exercises the auto tile selection.
        for bm in (8, None):
            out = fact_forward(params, xin, block_idx, mode, B, N, C, fact_dim,
                               scaler, block_m=bm, compute_dtype=jnp.float32)
            out = jax.block_until_ready(out)
            if not jnp.allclose(out, ref, atol=1e-5, rtol=1e-5):
                ok = False
                print(f"MISMATCH (f32) mode={mode} block_m={bm}: max err "
                      f"{float(jnp.max(jnp.abs(out - ref)))}")

        # Default bf16 I/O path (HBM-roofline optimisation) — loose tolerance.
        out_bf = fact_forward(params, xin, block_idx, mode, B, N, C, fact_dim,
                              scaler)
        out_bf = jax.block_until_ready(out_bf)
        if out_bf.dtype != jnp.bfloat16:
            ok = False
            print(f"WRONG DTYPE mode={mode}: {out_bf.dtype}")
        out_f32 = out_bf.astype(jnp.float32)
        if not jnp.allclose(out_f32, ref, atol=2e-2, rtol=5e-2):
            ok = False
            print(f"MISMATCH (bf16) mode={mode}: max err "
                  f"{float(jnp.max(jnp.abs(out_f32 - ref)))}")

    if ok:
        print("KERNEL_OK")
</pallas_src>

<mosaic_0001>
module attributes {stable_mosaic.version = 11 : i64} {
  func.func @_fact_kernel(%arg0: i32, %arg1: i32, %arg2: memref<8x32xf32, #tpu.memory_space<vmem>>, %arg3: memref<32x8xf32, #tpu.memory_space<vmem>>, %arg4: memref<8x96xf32, #tpu.memory_space<vmem>>, %arg5: memref<8x96xf32, #tpu.memory_space<vmem>>) attributes {dimension_semantics = [#tpu.dimension_semantics<parallel>, #tpu.dimension_semantics<parallel>], iteration_bounds = array<i64: 2, 1>, scalar_prefetch = 0 : i64, scratch_operands = 0 : i64, tpu.core_type = #tpu.core_type<tc>, window_params = [{transform_indices = @transform_0, window_bounds = array<i64: 8, 32>}, {pipeline_mode = #tpu.pipeline_mode<synchronous>, transform_indices = @transform_1, window_bounds = array<i64: 32, 8>}, {pipeline_mode = #tpu.pipeline_mode<synchronous>, transform_indices = @transform_2, window_bounds = array<i64: 8, 96>}, {transform_indices = @transform_3, window_bounds = array<i64: 8, 96>}]} {
    %c0 = arith.constant 0 : index
    %c0_0 = arith.constant 0 : index
    %0 = vector.load %arg2[%c0, %c0_0] : memref<8x32xf32, #tpu.memory_space<vmem>>, vector<8x32xf32>
    %c0_1 = arith.constant 0 : index
    %c0_2 = arith.constant 0 : index
    %1 = vector.load %arg3[%c0_1, %c0_2] : memref<32x8xf32, #tpu.memory_space<vmem>>, vector<32x8xf32>
    %cst = arith.constant dense<0.000000e+00> : vector<8x8xf32>
    %2 = tpu.matmul %0, %1, %cst {dimension_numbers = #tpu.dot_dimension_numbers<[1], [0], [0], [1], [0, 0, 1, 1], [], []>} : vector<8x32xf32>, vector<32x8xf32>, vector<8x8xf32> -> vector<8x8xf32>
    %c0_3 = arith.constant 0 : index
    %c0_4 = arith.constant 0 : index
    %3 = vector.load %arg4[%c0_3, %c0_4] : memref<8x96xf32, #tpu.memory_space<vmem>>, vector<8x96xf32>
    %cst_5 = arith.constant dense<0.000000e+00> : vector<8x96xf32>
    %4 = tpu.matmul %2, %3, %cst_5 {dimension_numbers = #tpu.dot_dimension_numbers<[1], [0], [0], [1], [0, 0, 1, 1], [], []>} : vector<8x8xf32>, vector<8x96xf32>, vector<8x96xf32> -> vector<8x96xf32>
    %c0_6 = arith.constant 0 : index
    %c0_7 = arith.constant 0 : index
    %5 = vector.load %arg5[%c0_6, %c0_7] : memref<8x96xf32, #tpu.memory_space<vmem>>, vector<8x96xf32>
    tpu.vector_store %arg5[%c0_6, %c0_7], %4 {strides = array<i32>} : memref<8x96xf32, #tpu.memory_space<vmem>>, vector<8x96xf32>,
    return
  }
  func.func @transform_0(%arg0: i32, %arg1: i32) -> (i32, i32) {
    %c0_i32 = arith.constant 0 : i32
    %c0_i32_0 = arith.constant 0 : i32
    return %arg0, %c0_i32 : i32, i32
  }
  func.func @transform_1(%arg0: i32, %arg1: i32) -> (i32, i32) {
    %c0_i32 = arith.constant 0 : i32
    %c0_i32_0 = arith.constant 0 : i32
    %c0_i32_1 = arith.constant 0 : i32
    return %c0_i32, %c0_i32_0 : i32, i32
  }
  func.func @transform_2(%arg0: i32, %arg1: i32) -> (i32, i32) {
    %c0_i32 = arith.constant 0 : i32
    %c0_i32_0 = arith.constant 0 : i32
    return %c0_i32, %arg1 : i32, i32
  }
  func.func @transform_3(%arg0: i32, %arg1: i32) -> (i32, i32) {
    %c0_i32 = arith.constant 0 : i32
    return %arg0, %arg1 : i32, i32
  }
}

module attributes {stable_mosaic.version = 11 : i64} {
  func.func @_fact_kernel(%arg0: i32, %arg1: i32, %arg2: memref<8x32xf32, #tpu.memory_space<vmem>>, %arg3: memref<32x8xf32, #tpu.memory_space<vmem>>, %arg4: memref<8x96xf32, #tpu.memory_space<vmem>>, %arg5: memref<8x96xf32, #tpu.memory_space<vmem>>) attributes {dimension_semantics = [#tpu.dimension_semantics<parallel>, #tpu.dimension_semantics<parallel>], iteration_bounds = array<i64: 2, 1>, scalar_prefetch = 0 : i64, scratch_operands = 0 : i64, tpu.core_type = #tpu.core_type<tc>, window_params = [{transform_indices = @transform_0, window_bounds = array<i64: 8, 32>}, {pipeline_mode = #tpu.pipeline_mode<synchronous>, transform_indices = @transform_1, window_bounds = array<i64: 32, 8>}, {transform_indices = @transform_2, window_bounds = array<i64: 8, 96>}, {transform_indices = @transform_3, window_bounds = array<i64: 8, 96>}]} {
    %c0 = arith.constant 0 : index
    %c0_0 = arith.constant 0 : index
    %0 = vector.load %arg2[%c0, %c0_0] : memref<8x32xf32, #tpu.memory_space<vmem>>, vector<8x32xf32>
    %c0_1 = arith.constant 0 : index
    %c0_2 = arith.constant 0 : index
    %1 = vector.load %arg3[%c0_1, %c0_2] : memref<32x8xf32, #tpu.memory_space<vmem>>, vector<32x8xf32>
    %cst = arith.constant dense<0.000000e+00> : vector<8x8xf32>
    %2 = tpu.matmul %0, %1, %cst {dimension_numbers = #tpu.dot_dimension_numbers<[1], [0], [0], [1], [0, 0, 1, 1], [], []>} : vector<8x32xf32>, vector<32x8xf32>, vector<8x8xf32> -> vector<8x8xf32>
    %c0_3 = arith.constant 0 : index
    %c0_4 = arith.constant 0 : index
    %3 = vector.load %arg4[%c0_3, %c0_4] : memref<8x96xf32, #tpu.memory_space<vmem>>, vector<8x96xf32>
    %cst_5 = arith.constant dense<0.000000e+00> : vector<8x96xf32>
    %4 = tpu.matmul %2, %3, %cst_5 {dimension_numbers = #tpu.dot_dimension_numbers<[1], [0], [0], [1], [0, 0, 1, 1], [], []>} : vector<8x8xf32>, vector<8x96xf32>, vector<8x96xf32> -> vector<8x96xf32>
    %c0_6 = arith.constant 0 : index
    %c0_7 = arith.constant 0 : index
    %5 = vector.load %arg5[%c0_6, %c0_7] : memref<8x96xf32, #tpu.memory_space<vmem>>, vector<8x96xf32>
    tpu.vector_store %arg5[%c0_6, %c0_7], %4 {strides = array<i32>} : memref<8x96xf32, #tpu.memory_space<vmem>>, vector<8x96xf32>,
    return
  }
  func.func @transform_0(%arg0: i32, %arg1: i32) -> (i32, i32) {
    %c0_i32 = arith.constant 0 : i32
    %c0_i32_0 = arith.constant 0 : i32
    return %arg0, %c0_i32 : i32, i32
  }
  func.func @transform_1(%arg0: i32, %arg1: i32) -> (i32, i32) {
    %c0_i32 = arith.constant 0 : i32
    %c0_i32_0 = arith.constant 0 : i32
    %c0_i32_1 = arith.constant 0 : i32
    return %c0_i32, %c0_i32_0 : i32, i32
  }
  func.func @transform_2(%arg0: i32, %arg1: i32) -> (i32, i32) {
    %c0_i32 = arith.constant 0 : i32
    %c0_i32_0 = arith.constant 0 : i32
    return %c0_i32, %arg1 : i32, i32
  }
  func.func @transform_3(%arg0: i32, %arg1: i32) -> (i32, i32) {
    %c0_i32 = arith.constant 0 : i32
    return %arg0, %arg1 : i32, i32
  }
}

</mosaic_0001>

<llo_original>
// kernel: tpu_custom_call.1
$region0: #{tpu_custom_call.1}
  #allocation0 [shape = 'u32[]', space=smem, size = 0x4, offset = 0x4, fixed_abs, tag = 'smem constant byte address 0x4 - core index']
  #allocation1 [shape = 'u32[144,128]{1,0:T(1,128)}', space=vmem, size = 0x12000, scoped, tag = 'internal scratch']
  %s0 = inlined_call_operand.vmem [shape: f32[16,32], index: 0, kind: input, shape index: {}]
  %s1 = inlined_call_operand.vmem [shape: f32[32,8], index: 1, kind: input, shape index: {}]
  %s2 = inlined_call_operand.vmem [shape: f32[8,96], index: 2, kind: input, shape index: {}]
  %s3 = inlined_call_operand.hbm [shape: f32[16,96], index: 3, kind: output, shape index: {}]
  %s4 = sld [smem:[#allocation0]]
  $region45: #{tpu_custom_call.1} parent=0
    _
  %s6 = ssub.s32 1, %s4
  %s7 = scalar_select 0, %s6, %s4
  $region1: #{tpu_custom_call.1} parent=0
    #allocation2 [shape = 'u8[8192]{0}', space=vmem, size = 0x2000, scoped, tag = 'output window, operand 0']
    #allocation3 [shape = 's32[2]{0}', space=sflag, size = 0x8, scoped, tag = 'scoped memory for tpu_custom_call.1']
    %8 = vsyncpa [#allocation3], 0
    %s9 = scalar_lea.sflag [#allocation3], 1
    %10 = vsyncpa %s9, 0
    loop: start=0, step=1, limit=4
    $region2: #{tpu_custom_call.1} parent=1 // loop_pre_header
      _
    $region3: #{tpu_custom_call.1} parent=1 // loop_header
      %s12 = sphi 0, %s16
      %p13 = scmp.ge.s32.totalorder %s12, 4
      %s19 = sphi 0, %s31
      %s20 = sphi 0, %s27
      %s21 = sphi 0, %s19
      %s22 = sphi 0, %s20
      %s23 = sphi 0, %s21
      %s24 = sphi 0, %s22
      %s34 = sphi 0, %s36
      %s37 = sphi 0, %s34
      %s38 = sphi 0, %s37
      %s54 = sphi 0, %s38
      %s58 = sphi 0, %s58
      %s60 = sphi 0, %s58
      %s61 = sphi 0, %s60
      %s75 = sphi 0, %s61
      %s81 = sphi 0, %s83
      %s84 = sphi 0, %s81
      %s85 = sphi 0, %s84
      %s101 = sphi 0, %s85
      %s109 = sphi 0, %s111
      %s112 = sphi 0, %s109
      %s113 = sphi 0, %s112
      %s129 = sphi 0, %s113
    $region4: #{tpu_custom_call.1} parent=1 // loop_header_branch
      %15 = sbr.rel (%p13) target = $region8
    $region5: #{tpu_custom_call.1} parent=1 // loop_body
      %s17 = ssub.s32 %s12, 1
      %s18 = ssub.s32 %s12, 2
      %s25 = sadd.s32 1, %s20
      %p26 = scmp.ge.s32.totalorder %s25, 1
      %s27 = scalar_select %p26, 0, %s25
      %s28 = sadd.s32 1, %s19
      %s29 = scalar_select %p26, %s28, %s19
      %p30 = scmp.ge.s32.totalorder %s29, 2
      %s31 = scalar_select %p30, 0, %s29
      %s32 = ssub.s32 %s19, %s31
      %p33 = scmp.eq.s32.totalorder %s32, 0
      %s35 = sadd.s32 %s34, 1
      %s36 = scalar_select %p33, %s34, %s35
      %p39 = pneg %p33
      %p40 = scmp.eq.s32.totalorder %s12, 1
      %p41 = por %p39, %p40
      %p42 = scmp.ne.s32.totalorder %s34, %s37
      %p43 = scmp.eq.s32.totalorder %s12, 0
      %p44 = por %p42, %p43
      %p45 = scmp.ne.s32.totalorder %s34, %s37
      %p46 = scmp.eq.s32.totalorder %s17, 1
      %p47 = por %p45, %p46
      %p48 = scmp.ne.s32.totalorder %s37, %s38
      %p49 = scmp.eq.s32.totalorder %s17, 0
      %p50 = por %p48, %p49
      %p51 = scmp.ne.s32.totalorder %s37, %s38
      %p52 = scmp.eq.s32.totalorder %s18, 1
      %p53 = por %p51, %p52
      %p55 = scmp.ne.s32.totalorder %s38, %s54
      %p56 = scmp.eq.s32.totalorder %s18, 0
      %p57 = por %p55, %p56
      %s59 = sadd.s32 %s58, 1
      %p62 = scmp.eq.s32.totalorder %s12, 1
      %p63 = scmp.ne.s32.totalorder %s58, %s60
      %p64 = scmp.eq.s32.totalorder %s12, 0
      %p65 = por %p63, %p64
      %p66 = scmp.ne.s32.totalorder %s58, %s60
      %p67 = scmp.eq.s32.totalorder %s17, 1
      %p68 = por %p66, %p67
      %p69 = scmp.ne.s32.totalorder %s60, %s61
      %p70 = scmp.eq.s32.totalorder %s17, 0
      %p71 = por %p69, %p70
      %p72 = scmp.ne.s32.totalorder %s60, %s61
      %p73 = scmp.eq.s32.totalorder %s18, 1
      %p74 = por %p72, %p73
      %p76 = scmp.ne.s32.totalorder %s61, %s75
      %p77 = scmp.eq.s32.totalorder %s18, 0
      %p78 = por %p76, %p77
      %s79 = ssub.s32 %s20, %s27
      %p80 = scmp.eq.s32.totalorder %s79, 0
      %s82 = sadd.s32 %s81, 1
      %s83 = scalar_select %p80, %s81, %s82
      %p86 = pneg %p80
      %p87 = scmp.eq.s32.totalorder %s12, 1
      %p88 = por %p86, %p87
      %p89 = scmp.ne.s32.totalorder %s81, %s84
      %p90 = scmp.eq.s32.totalorder %s12, 0
      %p91 = por %p89, %p90
      %p92 = scmp.ne.s32.totalorder %s81, %s84
      %p93 = scmp.eq.s32.totalorder %s17, 1
      %p94 = por %p92, %p93
      %p95 = scmp.ne.s32.totalorder %s84, %s85
      %p96 = scmp.eq.s32.totalorder %s17, 0
      %p97 = por %p95, %p96
      %p98 = scmp.ne.s32.totalorder %s84, %s85
      %p99 = scmp.eq.s32.totalorder %s18, 1
      %p100 = por %p98, %p99
      %p102 = scmp.ne.s32.totalorder %s85, %s101
      %p103 = scmp.eq.s32.totalorder %s18, 0
      %p104 = por %p102, %p103
      %s105 = ssub.s32 %s19, %s31
      %s106 = ssub.s32 %s20, %s27
      %s107 = sor.u32 %s105, %s106
      %p108 = scmp.eq.s32.totalorder %s107, 0
      %s110 = sadd.s32 %s109, 1
      %s111 = scalar_select %p108, %s109, %s110
      %p114 = pneg %p108
      %p115 = scmp.eq.s32.totalorder %s12, 1
      %p116 = por %p114, %p115
      %p117 = scmp.ne.s32.totalorder %s109, %s112
      %p118 = scmp.eq.s32.totalorder %s12, 0
      %p119 = por %p117, %p118
      %p120 = scmp.ne.s32.totalorder %s109, %s112
      %p121 = scmp.eq.s32.totalorder %s17, 1
      %p122 = por %p120, %p121
      %p123 = scmp.ne.s32.totalorder %s112, %s113
      %p124 = scmp.eq.s32.totalorder %s17, 0
      %p125 = por %p123, %p124
      %p126 = scmp.ne.s32.totalorder %s112, %s113
      %p127 = scmp.eq.s32.totalorder %s18, 1
      %p128 = por %p126, %p127
      %p130 = scmp.ne.s32.totalorder %s113, %s129
      %p131 = scmp.eq.s32.totalorder %s18, 0
      %p132 = por %p130, %p131
      %p133 = scmp.le.s32.totalorder 1, %s12
      %p134 = scmp.lt.s32.totalorder %s12, 3
      %p135 = pnand %p133, %p134
      %p136 = pneg %p135
      // Predicated region
      $region9: #{tpu_custom_call.1} parent=5 // pred_check
        _
      $region10: #{tpu_custom_call.1} parent=5 // pred_check_branch
        %138 = sbr.rel (%p135) target = $region12
      $region11: #{tpu_custom_call.1} parent=5 // pred_region
        %s139 = ssub.s32 %s12, 1
        // Predicated region
        $region13: #{tpu_custom_call.1} parent=11 // pred_check
          %p140 = pneg %p71
        $region14: #{tpu_custom_call.1} parent=11 // pred_check_branch
          %142 = sbr.rel (%p140) target = $region16
        $region15: #{tpu_custom_call.1} parent=11 // pred_region
          _
        $region16: #{tpu_custom_call.1} parent=11 // pred_fallthru
          _
        // Predicated region
        $region17: #{tpu_custom_call.1} parent=11 // pred_check
          %p143 = pneg %p97
        $region18: #{tpu_custom_call.1} parent=11 // pred_check_branch
          %145 = sbr.rel (%p143) target = $region20
        $region19: #{tpu_custom_call.1} parent=11 // pred_region
          %p146 = scmp.lt.s32.totalorder %s22, 0
          %s147 = scalar_select %p146, %s22, 0
          %s148 = smul.addr %s147, 8
          %s149 = scalar_lea.vmem %s2, %s148
        $region20: #{tpu_custom_call.1} parent=11 // pred_fallthru
          _
      $region12: #{tpu_custom_call.1} parent=5 // pred_fallthru
        _
      %p150 = scmp.lt.s32.totalorder %s12, 2
      // Predicated region
      $region21: #{tpu_custom_call.1} parent=5 // pred_check
        %p151 = pneg %p150
      $region22: #{tpu_custom_call.1} parent=5 // pred_check_branch
        %153 = sbr.rel (%p151) target = $region24
      $region23: #{tpu_custom_call.1} parent=5 // pred_region
        // Predicated region
        $region25: #{tpu_custom_call.1} parent=23 // pred_check
          %p154 = pneg %p44
        $region26: #{tpu_custom_call.1} parent=23 // pred_check_branch
          %156 = sbr.rel (%p154) target = $region28
        $region27: #{tpu_custom_call.1} parent=23 // pred_region
          %p157 = scmp.lt.s32.totalorder %s19, 1
          %s158 = scalar_select %p157, %s19, 1
          %s159 = smul.addr %s158, 8
          %s160 = scalar_lea.vmem %s0, %s159
        $region28: #{tpu_custom_call.1} parent=23 // pred_fallthru
          _
      $region24: #{tpu_custom_call.1} parent=5 // pred_fallthru
        _
      %p161 = scmp.le.s32.totalorder 1, %s12
      %p162 = scmp.lt.s32.totalorder %s12, 3
      %p163 = pnand %p161, %p162
      %p164 = pneg %p163
      // Predicated region
      $region29: #{tpu_custom_call.1} parent=5 // pred_check
        _
      $region30: #{tpu_custom_call.1} parent=5 // pred_check_branch
        %166 = sbr.rel (%p163) target = $region32
      $region31: #{tpu_custom_call.1} parent=5 // pred_region
        %s167 = ssub.s32 %s12, 1
        %p168 = scmp.lt.s32.totalorder %s21, 1
        %s169 = scalar_select %p168, %s21, 1
        %s170 = smul.addr %s169, 8
        %s171 = scalar_lea.vmem %s0, %s170
        %p172 = pneg %p50
        %p173 = pneg %p47
        %p174 = pneg %p71
        %p175 = pneg %p68
        %p176 = scmp.lt.s32.totalorder %s22, 0
        %s177 = scalar_select %p176, %s22, 0
        %s178 = smul.addr %s177, 8
        %s179 = scalar_lea.vmem %s2, %s178
        %p180 = pneg %p97
        %p181 = pneg %p94
        %p182 = pneg %p125
        %p183 = pneg %p122
        %s184 = sand.u32 %s112, 1
        %s185 = scalar_lea.sflag [#allocation3], %s184
        %s186 = sand.u32 %s112, 1
        %s187 = smul.addr %s186, 8
        %s188 = scalar_lea.vmem [#allocation2], %s187
        %p189 = scmp.lt.s32.totalorder %s21, 1
        %s190 = scalar_select %p189, %s21, 1
        %s191 = smul.addr %s190, 8
        %s192 = scalar_lea.vmem %s0, %s191
        %p193 = scmp.lt.s32.totalorder %s22, 0
        %s194 = scalar_select %p193, %s22, 0
        %s195 = smul.addr %s194, 8
        %s196 = scalar_lea.vmem %s2, %s195
        %v197 = vld [vmem:[%s192] sm:$0xff]
        %v198 = vld [vmem:[%s1] sm:$0xff]
        %v199 = vld [vmem:[%s1 + $0x8] sm:$0xff]
        %v200 = vld [vmem:[%s1 + $0x10] sm:$0xff]
        %v201 = vld [vmem:[%s1 + $0x18] sm:$0xff]
        %vm202 = vcmask 261120
        %v204 = vsel %vm202, %v197, 0
        %206 = vmatprep.subr.mxu0 0.0
        %207 = vmatpush1.msra.mxu0 0.0
        %208 = vmatprep.subr.mxu0 0.0
        %209 = vmatpush1.msra.mxu0 0.0
        %210 = vmatprep.subr.mxu0 0.0
        %211 = vmatpush1.msra.mxu0 0.0
        %212 = vmatprep.subr.mxu0 0.0
        %213 = vmatpush1.msra.mxu0 0.0
        %214 = vmatprep.subr.mxu0 0.0
        %215 = vmatpush1.msra.mxu0 0.0
        %216 = vmatprep.subr.mxu0 0.0
        %217 = vmatpush1.msra.mxu0 0.0
        %218 = vmatprep.subr.mxu0 0.0
        %219 = vmatpush1.msra.mxu0 0.0
        %220 = vmatprep.subr.mxu0 0.0
        %221 = vmatpush1.msra.mxu0 0.0
        %222 = vmatprep.subr.mxu0 0.0
        %223 = vmatpush1.msra.mxu0 0.0
        %224 = vmatprep.subr.mxu0 0.0
        %225 = vmatpush1.msra.mxu0 0.0
        %226 = vmatprep.subr.mxu0 0.0
        %227 = vmatpush1.msra.mxu0 0.0
        %228 = vmatprep.subr.mxu0 0.0
        %229 = vmatpush1.msra.mxu0 0.0
        %230 = vmatprep.subr.mxu0 0.0
        %231 = vmatpush1.msra.mxu0 %v201
        %232 = vmatprep.subr.mxu0 0.0
        %233 = vmatpush1.msra.mxu0 %v200
        %234 = vmatprep.subr.mxu0 0.0
        %235 = vmatpush1.msra.mxu0 %v199
        %236 = vmatprep.subr.mxu0 0.0
        %237 = vmatpush1.msra.mxu0 %v198
        %238 = vmatprep.subr.mxu0 0.0
        %239 = vmatpush2.msra.mxu0 0.0
        %240 = vmatprep.subr.mxu0 0.0
        %241 = vmatpush2.msra.mxu0 0.0
        %242 = vmatprep.subr.mxu0 0.0
        %243 = vmatpush2.msra.mxu0 0.0
        %244 = vmatprep.subr.mxu0 0.0
        %245 = vmatpush2.msra.mxu0 0.0
        %246 = vmatprep.subr.mxu0 0.0
        %247 = vmatpush2.msra.mxu0 0.0
        %248 = vmatprep.subr.mxu0 0.0
        %249 = vmatpush2.msra.mxu0 0.0
        %250 = vmatprep.subr.mxu0 0.0
        %251 = vmatpush2.msra.mxu0 0.0
        %252 = vmatprep.subr.mxu0 0.0
        %253 = vmatpush2.msra.mxu0 0.0
        %254 = vmatprep.subr.mxu0 0.0
        %255 = vmatpush2.msra.mxu0 0.0
        %256 = vmatprep.subr.mxu0 0.0
        %257 = vmatpush2.msra.mxu0 0.0
        %258 = vmatprep.subr.mxu0 0.0
        %259 = vmatpush2.msra.mxu0 0.0
        %260 = vmatprep.subr.mxu0 0.0
        %261 = vmatpush2.msra.mxu0 0.0
        %262 = vmatprep.subr.mxu0 0.0
        %263 = vmatpush2.msra.mxu0 0.0
        %264 = vmatprep.subr.mxu0 0.0
        %265 = vmatpush2.msra.mxu0 0.0
        %266 = vmatprep.subr.mxu0 0.0
        %267 = vmatpush2.msra.mxu0 0.0
        %268 = vmatprep.subr.mxu0 0.0
        %269 = vmatpush2.msra.mxu0 0.0
        %270 = vmatprep.mubr.f32.mxu0 0.0
        %271 = vmatmul.mubr.f32.gmra.mxu0 %v204
        %v272 = vpop.f32.mrf.mxu0
        %v273 = vadd.f32 0.0, %v272
        %v274 = vpop.f32.mrf.mxu0
        %275 = vdwg.mxu0
        %v276 = vld [vmem:[%s196] sm:$0xff]
        %vm277 = vcmask 64512
        %v279 = vsel %vm277, %v273, 0
        %281 = vmatprep.subr.mxu0 0.0
        %282 = vmatpush1.msra.mxu0 0.0
        %283 = vmatprep.subr.mxu0 0.0
        %284 = vmatpush1.msra.mxu0 0.0
        %285 = vmatprep.subr.mxu0 0.0
        %286 = vmatpush1.msra.mxu0 0.0
        %287 = vmatprep.subr.mxu0 0.0
        %288 = vmatpush1.msra.mxu0 0.0
        %289 = vmatprep.subr.mxu0 0.0
        %290 = vmatpush1.msra.mxu0 0.0
        %291 = vmatprep.subr.mxu0 0.0
        %292 = vmatpush1.msra.mxu0 0.0
        %293 = vmatprep.subr.mxu0 0.0
        %294 = vmatpush1.msra.mxu0 0.0
        %295 = vmatprep.subr.mxu0 0.0
        %296 = vmatpush1.msra.mxu0 0.0
        %297 = vmatprep.subr.mxu0 0.0
        %298 = vmatpush1.msra.mxu0 0.0
        %299 = vmatprep.subr.mxu0 0.0
        %300 = vmatpush1.msra.mxu0 0.0
        %301 = vmatprep.subr.mxu0 0.0
        %302 = vmatpush1.msra.mxu0 0.0
        %303 = vmatprep.subr.mxu0 0.0
        %304 = vmatpush1.msra.mxu0 0.0
        %305 = vmatprep.subr.mxu0 0.0
        %306 = vmatpush1.msra.mxu0 0.0
        %307 = vmatprep.subr.mxu0 0.0
        %308 = vmatpush1.msra.mxu0 0.0
        %309 = vmatprep.subr.mxu0 0.0
        %310 = vmatpush1.msra.mxu0 0.0
        %311 = vmatprep.subr.mxu0 0.0
        %312 = vmatpush1.msra.mxu0 %v276
        %313 = vmatprep.subr.mxu0 0.0
        %314 = vmatpush2.msra.mxu0 0.0
        %315 = vmatprep.subr.mxu0 0.0
        %316 = vmatpush2.msra.mxu0 0.0
        %317 = vmatprep.subr.mxu0 0.0
        %318 = vmatpush2.msra.mxu0 0.0
        %319 = vmatprep.subr.mxu0 0.0
        %320 = vmatpush2.msra.mxu0 0.0
        %321 = vmatprep.subr.mxu0 0.0
        %322 = vmatpush2.msra.mxu0 0.0
        %323 = vmatprep.subr.mxu0 0.0
        %324 = vmatpush2.msra.mxu0 0.0
        %325 = vmatprep.subr.mxu0 0.0
        %326 = vmatpush2.msra.mxu0 0.0
        %327 = vmatprep.subr.mxu0 0.0
        %328 = vmatpush2.msra.mxu0 0.0
        %329 = vmatprep.subr.mxu0 0.0
        %330 = vmatpush2.msra.mxu0 0.0
        %331 = vmatprep.subr.mxu0 0.0
        %332 = vmatpush2.msra.mxu0 0.0
        %333 = vmatprep.subr.mxu0 0.0
        %334 = vmatpush2.msra.mxu0 0.0
        %335 = vmatprep.subr.mxu0 0.0
        %336 = vmatpush2.msra.mxu0 0.0
        %337 = vmatprep.subr.mxu0 0.0
        %338 = vmatpush2.msra.mxu0 0.0
        %339 = vmatprep.subr.mxu0 0.0
        %340 = vmatpush2.msra.mxu0 0.0
        %341 = vmatprep.subr.mxu0 0.0
        %342 = vmatpush2.msra.mxu0 0.0
        %343 = vmatprep.subr.mxu0 0.0
        %344 = vmatpush2.msra.mxu0 0.0
        %345 = vmatprep.mubr.f32.mxu0 0.0
        %346 = vmatmul.mubr.f32.gmra.mxu0 %v279
        %v347 = vpop.f32.mrf.mxu0
        %v348 = vadd.f32 0.0, %v347
        %v349 = vpop.f32.mrf.mxu0
        %350 = vdwg.mxu0
        %vm351 = vcmask 785408
        %352 = vst.msk [vmem:[%s188] sm:$0xff] %vm351, %v348
        %s353 = sand.u32 %s112, 1
        %s354 = scalar_lea.sflag [#allocation3], %s353
        %s355 = sand.u32 %s112, 1
        %s356 = smul.addr %s355, 8
        %s357 = scalar_lea.vmem [#allocation2], %s356
        // Predicated region
        $region33: #{tpu_custom_call.1} parent=31 // pred_check
          %p358 = pneg %p122
        $region34: #{tpu_custom_call.1} parent=31 // pred_check_branch
          %360 = sbr.rel (%p358) target = $region36
        $region35: #{tpu_custom_call.1} parent=31 // pred_region
          %s362 = ssub.s32 128, 128
          %363 = vsyncadd %s354, %s362
          %s364 = sadd.s32 %s22, %s21
          %s365 = smul.addr %s364, 128
          %s366 = scalar_lea.hbm %s3, %s365
          %s368 = sshll.u32 %s357, 4
          %s369 = int_to_ptr.vmem [resolvable:$true] %s368
          %371 = dma.vmem_to_hbm [thread:$0]  %s369, 128, %s366, %s354
        $region36: #{tpu_custom_call.1} parent=31 // pred_fallthru
          _
      $region32: #{tpu_custom_call.1} parent=5 // pred_fallthru
        _
      %p372 = scmp.le.s32.totalorder 2, %s12
      // Predicated region
      $region37: #{tpu_custom_call.1} parent=5 // pred_check
        %p373 = pneg %p372
      $region38: #{tpu_custom_call.1} parent=5 // pred_check_branch
        %375 = sbr.rel (%p373) target = $region40
      $region39: #{tpu_custom_call.1} parent=5 // pred_region
        %s376 = ssub.s32 %s12, 2
        // Predicated region
        $region41: #{tpu_custom_call.1} parent=39 // pred_check
          %p377 = pneg %p128
        $region42: #{tpu_custom_call.1} parent=39 // pred_check_branch
          %379 = sbr.rel (%p377) target = $region44
        $region43: #{tpu_custom_call.1} parent=39 // pred_region
          %s380 = sand.u32 %s113, 1
          %s381 = scalar_lea.sflag [#allocation3], %s380
          %s382 = sand.u32 %s113, 1
          %s383 = smul.addr %s382, 8
          %s384 = scalar_lea.vmem [#allocation2], %s383
          %385 = dma.done %s381, 128
        $region44: #{tpu_custom_call.1} parent=39 // pred_fallthru
          _
      $region40: #{tpu_custom_call.1} parent=5 // pred_fallthru
        _
    $region6: #{tpu_custom_call.1} parent=1 // loop_footer
      %s16 = sadd.s32 1, %s12
    $region7: #{tpu_custom_call.1} parent=1 // loop_footer_branch
      %11 = sbr.rel target = $region3
    $region8: #{tpu_custom_call.1} parent=1 // loop_exit
      _
    %386 = vsyncpa [#allocation3], 1
    %s387 = scalar_lea.sflag [#allocation3], 1
    %388 = vsyncpa %s387, 1

// kernel: tpu_custom_call.1
$region0: #{tpu_custom_call.1}
  #allocation0 [shape = 'u32[]', space=smem, size = 0x4, offset = 0x4, fixed_abs, tag = 'smem constant byte address 0x4 - core index']
  #allocation1 [shape = 'u32[144,128]{1,0:T(1,128)}', space=vmem, size = 0x12000, scoped, tag = 'internal scratch']
  %s0 = inlined_call_operand.vmem [shape: f32[16,32], index: 0, kind: input, shape index: {}]
  %s1 = inlined_call_operand.vmem [shape: f32[32,8], index: 1, kind: input, shape index: {}]
  %s2 = inlined_call_operand.vmem [shape: f32[8,96], index: 2, kind: input, shape index: {}]
  %s3 = inlined_call_operand.hbm [shape: f32[16,96], index: 3, kind: output, shape index: {}]
  %s4 = sld [smem:[#allocation0]]
  $region45: #{tpu_custom_call.1} parent=0
    _
  %s6 = ssub.s32 1, %s4
  %s7 = scalar_select 0, %s6, %s4
  $region1: #{tpu_custom_call.1} parent=0
    #allocation2 [shape = 'u8[8192]{0}', space=vmem, size = 0x2000, scoped, tag = 'output window, operand 0']
    #allocation3 [shape = 's32[2]{0}', space=sflag, size = 0x8, scoped, tag = 'scoped memory for tpu_custom_call.1']
    %8 = vsyncpa [#allocation3], 0
    %s9 = scalar_lea.sflag [#allocation3], 1
    %10 = vsyncpa %s9, 0
    loop: start=0, step=1, limit=4
    $region2: #{tpu_custom_call.1} parent=1 // loop_pre_header
      _
    $region3: #{tpu_custom_call.1} parent=1 // loop_header
      %s12 = sphi 0, %s16
      %p13 = scmp.ge.s32.totalorder %s12, 4
      %s19 = sphi 0, %s31
      %s20 = sphi 0, %s27
      %s21 = sphi 0, %s19
      %s22 = sphi 0, %s20
      %s23 = sphi 0, %s21
      %s24 = sphi 0, %s22
      %s34 = sphi 0, %s36
      %s37 = sphi 0, %s34
      %s38 = sphi 0, %s37
      %s54 = sphi 0, %s38
      %s58 = sphi 0, %s58
      %s60 = sphi 0, %s58
      %s61 = sphi 0, %s60
      %s75 = sphi 0, %s61
      %s81 = sphi 0, %s83
      %s84 = sphi 0, %s81
      %s85 = sphi 0, %s84
      %s101 = sphi 0, %s85
      %s109 = sphi 0, %s111
      %s112 = sphi 0, %s109
      %s113 = sphi 0, %s112
      %s129 = sphi 0, %s113
    $region4: #{tpu_custom_call.1} parent=1 // loop_header_branch
      %15 = sbr.rel (%p13) target = $region8
    $region5: #{tpu_custom_call.1} parent=1 // loop_body
      %s17 = ssub.s32 %s12, 1
      %s18 = ssub.s32 %s12, 2
      %s25 = sadd.s32 1, %s20
      %p26 = scmp.ge.s32.totalorder %s25, 1
      %s27 = scalar_select %p26, 0, %s25
      %s28 = sadd.s32 1, %s19
      %s29 = scalar_select %p26, %s28, %s19
      %p30 = scmp.ge.s32.totalorder %s29, 2
      %s31 = scalar_select %p30, 0, %s29
      %s32 = ssub.s32 %s19, %s31
      %p33 = scmp.eq.s32.totalorder %s32, 0
      %s35 = sadd.s32 %s34, 1
      %s36 = scalar_select %p33, %s34, %s35
      %p39 = pneg %p33
      %p40 = scmp.eq.s32.totalorder %s12, 1
      %p41 = por %p39, %p40
      %p42 = scmp.ne.s32.totalorder %s34, %s37
      %p43 = scmp.eq.s32.totalorder %s12, 0
      %p44 = por %p42, %p43
      %p45 = scmp.ne.s32.totalorder %s34, %s37
      %p46 = scmp.eq.s32.totalorder %s17, 1
      %p47 = por %p45, %p46
      %p48 = scmp.ne.s32.totalorder %s37, %s38
      %p49 = scmp.eq.s32.totalorder %s17, 0
      %p50 = por %p48, %p49
      %p51 = scmp.ne.s32.totalorder %s37, %s38
      %p52 = scmp.eq.s32.totalorder %s18, 1
      %p53 = por %p51, %p52
      %p55 = scmp.ne.s32.totalorder %s38, %s54
      %p56 = scmp.eq.s32.totalorder %s18, 0
      %p57 = por %p55, %p56
      %s59 = sadd.s32 %s58, 1
      %p62 = scmp.eq.s32.totalorder %s12, 1
      %p63 = scmp.ne.s32.totalorder %s58, %s60
      %p64 = scmp.eq.s32.totalorder %s12, 0
      %p65 = por %p63, %p64
      %p66 = scmp.ne.s32.totalorder %s58, %s60
      %p67 = scmp.eq.s32.totalorder %s17, 1
      %p68 = por %p66, %p67
      %p69 = scmp.ne.s32.totalorder %s60, %s61
      %p70 = scmp.eq.s32.totalorder %s17, 0
      %p71 = por %p69, %p70
      %p72 = scmp.ne.s32.totalorder %s60, %s61
      %p73 = scmp.eq.s32.totalorder %s18, 1
      %p74 = por %p72, %p73
      %p76 = scmp.ne.s32.totalorder %s61, %s75
      %p77 = scmp.eq.s32.totalorder %s18, 0
      %p78 = por %p76, %p77
      %s79 = ssub.s32 %s20, %s27
      %p80 = scmp.eq.s32.totalorder %s79, 0
      %s82 = sadd.s32 %s81, 1
      %s83 = scalar_select %p80, %s81, %s82
      %p86 = pneg %p80
      %p87 = scmp.eq.s32.totalorder %s12, 1
      %p88 = por %p86, %p87
      %p89 = scmp.ne.s32.totalorder %s81, %s84
      %p90 = scmp.eq.s32.totalorder %s12, 0
      %p91 = por %p89, %p90
      %p92 = scmp.ne.s32.totalorder %s81, %s84
      %p93 = scmp.eq.s32.totalorder %s17, 1
      %p94 = por %p92, %p93
      %p95 = scmp.ne.s32.totalorder %s84, %s85
      %p96 = scmp.eq.s32.totalorder %s17, 0
      %p97 = por %p95, %p96
      %p98 = scmp.ne.s32.totalorder %s84, %s85
      %p99 = scmp.eq.s32.totalorder %s18, 1
      %p100 = por %p98, %p99
      %p102 = scmp.ne.s32.totalorder %s85, %s101
      %p103 = scmp.eq.s32.totalorder %s18, 0
      %p104 = por %p102, %p103
      %s105 = ssub.s32 %s19, %s31
      %s106 = ssub.s32 %s20, %s27
      %s107 = sor.u32 %s105, %s106
      %p108 = scmp.eq.s32.totalorder %s107, 0
      %s110 = sadd.s32 %s109, 1
      %s111 = scalar_select %p108, %s109, %s110
      %p114 = pneg %p108
      %p115 = scmp.eq.s32.totalorder %s12, 1
      %p116 = por %p114, %p115
      %p117 = scmp.ne.s32.totalorder %s109, %s112
      %p118 = scmp.eq.s32.totalorder %s12, 0
      %p119 = por %p117, %p118
      %p120 = scmp.ne.s32.totalorder %s109, %s112
      %p121 = scmp.eq.s32.totalorder %s17, 1
      %p122 = por %p120, %p121
      %p123 = scmp.ne.s32.totalorder %s112, %s113
      %p124 = scmp.eq.s32.totalorder %s17, 0
      %p125 = por %p123, %p124
      %p126 = scmp.ne.s32.totalorder %s112, %s113
      %p127 = scmp.eq.s32.totalorder %s18, 1
      %p128 = por %p126, %p127
      %p130 = scmp.ne.s32.totalorder %s113, %s129
      %p131 = scmp.eq.s32.totalorder %s18, 0
      %p132 = por %p130, %p131
      %p133 = scmp.le.s32.totalorder 1, %s12
      %p134 = scmp.lt.s32.totalorder %s12, 3
      %p135 = pnand %p133, %p134
      %p136 = pneg %p135
      // Predicated region
      $region9: #{tpu_custom_call.1} parent=5 // pred_check
        _
      $region10: #{tpu_custom_call.1} parent=5 // pred_check_branch
        %138 = sbr.rel (%p135) target = $region12
      $region11: #{tpu_custom_call.1} parent=5 // pred_region
        %s139 = ssub.s32 %s12, 1
        // Predicated region
        $region13: #{tpu_custom_call.1} parent=11 // pred_check
          %p140 = pneg %p71
        $region14: #{tpu_custom_call.1} parent=11 // pred_check_branch
          %142 = sbr.rel (%p140) target = $region16
        $region15: #{tpu_custom_call.1} parent=11 // pred_region
          _
        $region16: #{tpu_custom_call.1} parent=11 // pred_fallthru
          _
        // Predicated region
        $region17: #{tpu_custom_call.1} parent=11 // pred_check
          %p143 = pneg %p97
        $region18: #{tpu_custom_call.1} parent=11 // pred_check_branch
          %145 = sbr.rel (%p143) target = $region20
        $region19: #{tpu_custom_call.1} parent=11 // pred_region
          %p146 = scmp.lt.s32.totalorder %s22, 0
          %s147 = scalar_select %p146, %s22, 0
          %s148 = smul.addr %s147, 8
          %s149 = scalar_lea.vmem %s2, %s148
        $region20: #{tpu_custom_call.1} parent=11 // pred_fallthru
          _
      $region12: #{tpu_custom_call.1} parent=5 // pred_fallthru
        _
      %p150 = scmp.lt.s32.totalorder %s12, 2
      // Predicated region
      $region21: #{tpu_custom_call.1} parent=5 // pred_check
        %p151 = pneg %p150
      $region22: #{tpu_custom_call.1} parent=5 // pred_check_branch
        %153 = sbr.rel (%p151) target = $region24
      $region23: #{tpu_custom_call.1} parent=5 // pred_region
        // Predicated region
        $region25: #{tpu_custom_call.1} parent=23 // pred_check
          %p154 = pneg %p44
        $region26: #{tpu_custom_call.1} parent=23 // pred_check_branch
          %156 = sbr.rel (%p154) target = $region28
        $region27: #{tpu_custom_call.1} parent=23 // pred_region
          %p157 = scmp.lt.s32.totalorder %s19, 1
          %s158 = scalar_select %p157, %s19, 1
          %s159 = smul.addr %s158, 8
          %s160 = scalar_lea.vmem %s0, %s159
        $region28: #{tpu_custom_call.1} parent=23 // pred_fallthru
          _
      $region24: #{tpu_custom_call.1} parent=5 // pred_fallthru
        _
      %p161 = scmp.le.s32.totalorder 1, %s12
      %p162 = scmp.lt.s32.totalorder %s12, 3
      %p163 = pnand %p161, %p162
      %p164 = pneg %p163
      // Predicated region
      $region29: #{tpu_custom_call.1} parent=5 // pred_check
        _
      $region30: #{tpu_custom_call.1} parent=5 // pred_check_branch
        %166 = sbr.rel (%p163) target = $region32
      $region31: #{tpu_custom_call.1} parent=5 // pred_region
        %s167 = ssub.s32 %s12, 1
        %p168 = scmp.lt.s32.totalorder %s21, 1
        %s169 = scalar_select %p168, %s21, 1
        %s170 = smul.addr %s169, 8
        %s171 = scalar_lea.vmem %s0, %s170
        %p172 = pneg %p50
        %p173 = pneg %p47
        %p174 = pneg %p71
        %p175 = pneg %p68
        %p176 = scmp.lt.s32.totalorder %s22, 0
        %s177 = scalar_select %p176, %s22, 0
        %s178 = smul.addr %s177, 8
        %s179 = scalar_lea.vmem %s2, %s178
        %p180 = pneg %p97
        %p181 = pneg %p94
        %p182 = pneg %p125
        %p183 = pneg %p122
        %s184 = sand.u32 %s112, 1
        %s185 = scalar_lea.sflag [#allocation3], %s184
        %s186 = sand.u32 %s112, 1
        %s187 = smul.addr %s186, 8
        %s188 = scalar_lea.vmem [#allocation2], %s187
        %p189 = scmp.lt.s32.totalorder %s21, 1
        %s190 = scalar_select %p189, %s21, 1
        %s191 = smul.addr %s190, 8
        %s192 = scalar_lea.vmem %s0, %s191
        %p193 = scmp.lt.s32.totalorder %s22, 0
        %s194 = scalar_select %p193, %s22, 0
        %s195 = smul.addr %s194, 8
        %s196 = scalar_lea.vmem %s2, %s195
        %v197 = vld [vmem:[%s192] sm:$0xff]
        %v198 = vld [vmem:[%s1] sm:$0xff]
        %v199 = vld [vmem:[%s1 + $0x8] sm:$0xff]
        %v200 = vld [vmem:[%s1 + $0x10] sm:$0xff]
        %v201 = vld [vmem:[%s1 + $0x18] sm:$0xff]
        %vm202 = vcmask 261120
        %v204 = vsel %vm202, %v197, 0
        %206 = vmatprep.subr.mxu0 0.0
        %207 = vmatpush1.msra.mxu0 0.0
        %208 = vmatprep.subr.mxu0 0.0
        %209 = vmatpush1.msra.mxu0 0.0
        %210 = vmatprep.subr.mxu0 0.0
        %211 = vmatpush1.msra.mxu0 0.0
        %212 = vmatprep.subr.mxu0 0.0
        %213 = vmatpush1.msra.mxu0 0.0
        %214 = vmatprep.subr.mxu0 0.0
        %215 = vmatpush1.msra.mxu0 0.0
        %216 = vmatprep.subr.mxu0 0.0
        %217 = vmatpush1.msra.mxu0 0.0
        %218 = vmatprep.subr.mxu0 0.0
        %219 = vmatpush1.msra.mxu0 0.0
        %220 = vmatprep.subr.mxu0 0.0
        %221 = vmatpush1.msra.mxu0 0.0
        %222 = vmatprep.subr.mxu0 0.0
        %223 = vmatpush1.msra.mxu0 0.0
        %224 = vmatprep.subr.mxu0 0.0
        %225 = vmatpush1.msra.mxu0 0.0
        %226 = vmatprep.subr.mxu0 0.0
        %227 = vmatpush1.msra.mxu0 0.0
        %228 = vmatprep.subr.mxu0 0.0
        %229 = vmatpush1.msra.mxu0 0.0
        %230 = vmatprep.subr.mxu0 0.0
        %231 = vmatpush1.msra.mxu0 %v201
        %232 = vmatprep.subr.mxu0 0.0
        %233 = vmatpush1.msra.mxu0 %v200
        %234 = vmatprep.subr.mxu0 0.0
        %235 = vmatpush1.msra.mxu0 %v199
        %236 = vmatprep.subr.mxu0 0.0
        %237 = vmatpush1.msra.mxu0 %v198
        %238 = vmatprep.subr.mxu0 0.0
        %239 = vmatpush2.msra.mxu0 0.0
        %240 = vmatprep.subr.mxu0 0.0
        %241 = vmatpush2.msra.mxu0 0.0
        %242 = vmatprep.subr.mxu0 0.0
        %243 = vmatpush2.msra.mxu0 0.0
        %244 = vmatprep.subr.mxu0 0.0
        %245 = vmatpush2.msra.mxu0 0.0
        %246 = vmatprep.subr.mxu0 0.0
        %247 = vmatpush2.msra.mxu0 0.0
        %248 = vmatprep.subr.mxu0 0.0
        %249 = vmatpush2.msra.mxu0 0.0
        %250 = vmatprep.subr.mxu0 0.0
        %251 = vmatpush2.msra.mxu0 0.0
        %252 = vmatprep.subr.mxu0 0.0
        %253 = vmatpush2.msra.mxu0 0.0
        %254 = vmatprep.subr.mxu0 0.0
        %255 = vmatpush2.msra.mxu0 0.0
        %256 = vmatprep.subr.mxu0 0.0
        %257 = vmatpush2.msra.mxu0 0.0
        %258 = vmatprep.subr.mxu0 0.0
        %259 = vmatpush2.msra.mxu0 0.0
        %260 = vmatprep.subr.mxu0 0.0
        %261 = vmatpush2.msra.mxu0 0.0
        %262 = vmatprep.subr.mxu0 0.0
        %263 = vmatpush2.msra.mxu0 0.0
        %264 = vmatprep.subr.mxu0 0.0
        %265 = vmatpush2.msra.mxu0 0.0
        %266 = vmatprep.subr.mxu0 0.0
        %267 = vmatpush2.msra.mxu0 0.0
        %268 = vmatprep.subr.mxu0 0.0
        %269 = vmatpush2.msra.mxu0 0.0
        %270 = vmatprep.mubr.f32.mxu0 0.0
        %271 = vmatmul.mubr.f32.gmra.mxu0 %v204
        %v272 = vpop.f32.mrf.mxu0
        %v273 = vadd.f32 0.0, %v272
        %v274 = vpop.f32.mrf.mxu0
        %275 = vdwg.mxu0
        %v276 = vld [vmem:[%s196] sm:$0xff]
        %vm277 = vcmask 64512
        %v279 = vsel %vm277, %v273, 0
        %281 = vmatprep.subr.mxu0 0.0
        %282 = vmatpush1.msra.mxu0 0.0
        %283 = vmatprep.subr.mxu0 0.0
        %284 = vmatpush1.msra.mxu0 0.0
        %285 = vmatprep.subr.mxu0 0.0
        %286 = vmatpush1.msra.mxu0 0.0
        %287 = vmatprep.subr.mxu0 0.0
        %288 = vmatpush1.msra.mxu0 0.0
        %289 = vmatprep.subr.mxu0 0.0
        %290 = vmatpush1.msra.mxu0 0.0
        %291 = vmatprep.subr.mxu0 0.0
        %292 = vmatpush1.msra.mxu0 0.0
        %293 = vmatprep.subr.mxu0 0.0
        %294 = vmatpush1.msra.mxu0 0.0
        %295 = vmatprep.subr.mxu0 0.0
        %296 = vmatpush1.msra.mxu0 0.0
        %297 = vmatprep.subr.mxu0 0.0
        %298 = vmatpush1.msra.mxu0 0.0
        %299 = vmatprep.subr.mxu0 0.0
        %300 = vmatpush1.msra.mxu0 0.0
        %301 = vmatprep.subr.mxu0 0.0
        %302 = vmatpush1.msra.mxu0 0.0
        %303 = vmatprep.subr.mxu0 0.0
        %304 = vmatpush1.msra.mxu0 0.0
        %305 = vmatprep.subr.mxu0 0.0
        %306 = vmatpush1.msra.mxu0 0.0
        %307 = vmatprep.subr.mxu0 0.0
        %308 = vmatpush1.msra.mxu0 0.0
        %309 = vmatprep.subr.mxu0 0.0
        %310 = vmatpush1.msra.mxu0 0.0
        %311 = vmatprep.subr.mxu0 0.0
        %312 = vmatpush1.msra.mxu0 %v276
        %313 = vmatprep.subr.mxu0 0.0
        %314 = vmatpush2.msra.mxu0 0.0
        %315 = vmatprep.subr.mxu0 0.0
        %316 = vmatpush2.msra.mxu0 0.0
        %317 = vmatprep.subr.mxu0 0.0
        %318 = vmatpush2.msra.mxu0 0.0
        %319 = vmatprep.subr.mxu0 0.0
        %320 = vmatpush2.msra.mxu0 0.0
        %321 = vmatprep.subr.mxu0 0.0
        %322 = vmatpush2.msra.mxu0 0.0
        %323 = vmatprep.subr.mxu0 0.0
        %324 = vmatpush2.msra.mxu0 0.0
        %325 = vmatprep.subr.mxu0 0.0
        %326 = vmatpush2.msra.mxu0 0.0
        %327 = vmatprep.subr.mxu0 0.0
        %328 = vmatpush2.msra.mxu0 0.0
        %329 = vmatprep.subr.mxu0 0.0
        %330 = vmatpush2.msra.mxu0 0.0
        %331 = vmatprep.subr.mxu0 0.0
        %332 = vmatpush2.msra.mxu0 0.0
        %333 = vmatprep.subr.mxu0 0.0
        %334 = vmatpush2.msra.mxu0 0.0
        %335 = vmatprep.subr.mxu0 0.0
        %336 = vmatpush2.msra.mxu0 0.0
        %337 = vmatprep.subr.mxu0 0.0
        %338 = vmatpush2.msra.mxu0 0.0
        %339 = vmatprep.subr.mxu0 0.0
        %340 = vmatpush2.msra.mxu0 0.0
        %341 = vmatprep.subr.mxu0 0.0
        %342 = vmatpush2.msra.mxu0 0.0
        %343 = vmatprep.subr.mxu0 0.0
        %344 = vmatpush2.msra.mxu0 0.0
        %345 = vmatprep.mubr.f32.mxu0 0.0
        %346 = vmatmul.mubr.f32.gmra.mxu0 %v279
        %v347 = vpop.f32.mrf.mxu0
        %v348 = vadd.f32 0.0, %v347
        %v349 = vpop.f32.mrf.mxu0
        %350 = vdwg.mxu0
        %vm351 = vcmask 785408
        %352 = vst.msk [vmem:[%s188] sm:$0xff] %vm351, %v348
        %s353 = sand.u32 %s112, 1
        %s354 = scalar_lea.sflag [#allocation3], %s353
        %s355 = sand.u32 %s112, 1
        %s356 = smul.addr %s355, 8
        %s357 = scalar_lea.vmem [#allocation2], %s356
        // Predicated region
        $region33: #{tpu_custom_call.1} parent=31 // pred_check
          %p358 = pneg %p122
        $region34: #{tpu_custom_call.1} parent=31 // pred_check_branch
          %360 = sbr.rel (%p358) target = $region36
        $region35: #{tpu_custom_call.1} parent=31 // pred_region
          %s362 = ssub.s32 128, 128
          %363 = vsyncadd %s354, %s362
          %s364 = sadd.s32 %s22, %s21
          %s365 = smul.addr %s364, 128
          %s366 = scalar_lea.hbm %s3, %s365
          %s368 = sshll.u32 %s357, 4
          %s369 = int_to_ptr.vmem [resolvable:$true] %s368
          %371 = dma.vmem_to_hbm [thread:$0]  %s369, 128, %s366, %s354
        $region36: #{tpu_custom_call.1} parent=31 // pred_fallthru
          _
      $region32: #{tpu_custom_call.1} parent=5 // pred_fallthru
        _
      %p372 = scmp.le.s32.totalorder 2, %s12
      // Predicated region
      $region37: #{tpu_custom_call.1} parent=5 // pred_check
        %p373 = pneg %p372
      $region38: #{tpu_custom_call.1} parent=5 // pred_check_branch
        %375 = sbr.rel (%p373) target = $region40
      $region39: #{tpu_custom_call.1} parent=5 // pred_region
        %s376 = ssub.s32 %s12, 2
        // Predicated region
        $region41: #{tpu_custom_call.1} parent=39 // pred_check
          %p377 = pneg %p128
        $region42: #{tpu_custom_call.1} parent=39 // pred_check_branch
          %379 = sbr.rel (%p377) target = $region44
        $region43: #{tpu_custom_call.1} parent=39 // pred_region
          %s380 = sand.u32 %s113, 1
          %s381 = scalar_lea.sflag [#allocation3], %s380
          %s382 = sand.u32 %s113, 1
          %s383 = smul.addr %s382, 8
          %s384 = scalar_lea.vmem [#allocation2], %s383
          %385 = dma.done %s381, 128
        $region44: #{tpu_custom_call.1} parent=39 // pred_fallthru
          _
      $region40: #{tpu_custom_call.1} parent=5 // pred_fallthru
        _
    $region6: #{tpu_custom_call.1} parent=1 // loop_footer
      %s16 = sadd.s32 1, %s12
    $region7: #{tpu_custom_call.1} parent=1 // loop_footer_branch
      %11 = sbr.rel target = $region3
    $region8: #{tpu_custom_call.1} parent=1 // loop_exit
      _
    %386 = vsyncpa [#allocation3], 1
    %s387 = scalar_lea.sflag [#allocation3], 1
    %388 = vsyncpa %s387, 1

</llo_original>
